<compile_context>
chip_gen: v7x
topology: tpu7x:2x2x1
jax: 0.10.0
libtpu: 0.0.40
codegen_flags: <defaults>
</compile_context>

<pallas_src>
import functools

import jax
import jax.numpy as jnp
from jax.experimental import pallas as pl
from jax.experimental.pallas import tpu as pltpu


def dnn_kernel(x_ref, w1_ref, b1_ref, w2_ref, b2_ref, w3_ref, b3_ref,
               w4_ref, b4_ref, o_ref):
    x = x_ref[...]                                                  # (1, TN)  batch on lanes

    # fc1 + ReLU : in_features == 1 -> pure VPU broadcast outer product (no MXU).
    h1 = jnp.maximum(w1_ref[...] * x + b1_ref[...], 0.0)           # (u, TN) f32

    # fc2 + Softsign : (u,u) @ (u,TN) on the MXU in bf16, f32 accumulate; recip on EUP.
    z2 = jnp.dot(w2_ref[...], h1.astype(jnp.bfloat16),
                 preferred_element_type=jnp.float32) + b2_ref[...]  # (u, TN) f32
    h2 = z2 * pl.reciprocal(1.0 + jnp.abs(z2), approx=True)         # softsign

    # fc3 + Tanh : second bf16 matmul; tanh goes to the EUP.
    z3 = jnp.dot(w3_ref[...], h2.astype(jnp.bfloat16),
                 preferred_element_type=jnp.float32) + b3_ref[...]  # (u, TN) f32
    h3 = jnp.tanh(z3)

    # fc4 + Tanh : out_features == 1 -> VPU multiply + cross-sublane reduction (no MXU).
    z4 = jnp.sum(h3 * w4_ref[...], axis=0, keepdims=True) + b4_ref[...]  # (1, TN)
    o_ref[...] = jnp.tanh(z4)


@functools.partial(jax.jit, static_argnames=("tile_n",))
def deep_neural_network(x, params, *, tile_n=4096):
    """x: (N, 1) float32. params: dict with w1(u,1) b1(u,1) w2(u,u) b2(u,1)
    w3(u,u) b3(u,1) w4(u,1) b4(1,1) (PyTorch (out,in) orientation, fc4 transposed)."""
    assert tile_n % 128 == 0, "tile_n must be a multiple of 128 (lane width)"
    N = x.shape[0]
    u = params["w1"].shape[0]

    # Lane-aligned batch length and tile choice.
    n_lane = pl.cdiv(N, 128) * 128
    if n_lane <= tile_n:
        # Whole batch fits in one tile.  If it is big enough, split in two so the
        # "parallel" grid axis can still use both TensorCores on v7x.
        tn = n_lane // 2 if (n_lane >= 256 and n_lane % 256 == 0) else n_lane
    else:
        tn = tile_n
    n_tiles = pl.cdiv(n_lane, tn)
    n_pad = n_tiles * tn

    # Host-side layout: batch along the 128-lane axis.  Fast path: no pad/copy when the
    # batch already fills whole tiles; otherwise zero-pad the tail lanes (the garbage the
    # pad produces downstream is sliced off below).
    if N == n_pad:
        xt = x.reshape(1, N)
    else:
        xt = jnp.zeros((1, n_pad), jnp.float32).at[0, :N].set(x[:, 0])

    # Halve MXU cycles / weight DMA: bf16 weights for the two real matmuls (f32 accum).
    w2 = params["w2"].astype(jnp.bfloat16)
    w3 = params["w3"].astype(jnp.bfloat16)

    full = lambda i: (0, 0)  # weights: one resident block for every grid step
    out = pl.pallas_call(
        dnn_kernel,
        out_shape=jax.ShapeDtypeStruct((1, n_pad), jnp.float32),
        grid_spec=pltpu.PrefetchScalarGridSpec(
            num_scalar_prefetch=0,
            grid=(n_tiles,),
            in_specs=[
                pl.BlockSpec((1, tn), lambda i: (0, i)),   # x     (1, TN)
                pl.BlockSpec((u, 1), full),                # w1    (u, 1)  f32
                pl.BlockSpec((u, 1), full),                # b1    (u, 1)  f32
                pl.BlockSpec((u, u), full),                # w2    (u, u)  bf16
                pl.BlockSpec((u, 1), full),                # b2    (u, 1)  f32
                pl.BlockSpec((u, u), full),                # w3    (u, u)  bf16
                pl.BlockSpec((u, 1), full),                # b3    (u, 1)  f32
                pl.BlockSpec((u, 1), full),                # w4    (u, 1)  f32
                pl.BlockSpec((1, 1), full),                # b4    (1, 1)  f32
            ],
            out_specs=pl.BlockSpec((1, tn), lambda i: (0, i)),
        ),
        compiler_params=pltpu.CompilerParams(
            dimension_semantics=("parallel",),             # megacore on v7x, no-op on v5e/v6e
        ),
    )(xt, params["w1"], params["b1"], w2, params["b2"],
      w3, params["b3"], params["w4"], params["b4"])

    if N == n_pad:
        return out.reshape(N, 1)
    return out[0, :N].reshape(N, 1)


def init_params(key, u):
    """Deterministic init mimicking nn.Linear (uniform +/- 1/sqrt(fan_in)).
    Weights stored (out_features, in_features); biases stored as columns (out, 1)."""
    def linear(key, fan_in, fan_out):
        kw, kb = jax.random.split(key)
        bound = 1.0 / jnp.sqrt(float(fan_in))
        w = jax.random.uniform(kw, (fan_out, fan_in), jnp.float32, -bound, bound)
        b = jax.random.uniform(kb, (fan_out, 1), jnp.float32, -bound, bound)
        return w, b

    k1, k2, k3, k4 = jax.random.split(key, 4)
    w1, b1 = linear(k1, 1, u)            # (u, 1), (u, 1)
    w2, b2 = linear(k2, u, u)            # (u, u), (u, 1)
    w3, b3 = linear(k3, u, u)            # (u, u), (u, 1)
    w4, b4 = linear(k4, u, 1)            # (1, u), (1, 1)
    return {"w1": w1, "b1": b1, "w2": w2, "b2": b2,
            "w3": w3, "b3": b3, "w4": w4.T, "b4": b4}   # keep w4 as (u, 1)


def reference_forward(x, p):
    """Pure-JAX reference matching the PyTorch forward (batch-major math, full f32)."""
    h1 = jnp.maximum(x @ p["w1"].T + p["b1"].T, 0.0)     # (N, u)
    z2 = h1 @ p["w2"].T + p["b2"].T
    h2 = z2 / (1.0 + jnp.abs(z2))                        # softsign
    h3 = jnp.tanh(h2 @ p["w3"].T + p["b3"].T)
    return jnp.tanh(h3 @ p["w4"] + p["b4"])              # (N, 1)


if __name__ == "__main__":
    u = 32     # hidden width

    key = jax.random.PRNGKey(0)
    kx, kx2, kp = jax.random.split(key, 3)
    params = init_params(kp, u)

    # Ragged batch (exercises the zero-pad path).
    N = 8
    x = jax.random.uniform(kx, (N, 1), jnp.float32, -1.0, 1.0)   # ~ 2*rand - 1
    out = jax.block_until_ready(deep_neural_network(x, params))
    ref = reference_forward(x, params)
    assert out.shape == (N, 1)
    # Tolerance deliberately widened for bf16 MXU inputs + EUP approx reciprocal.
    assert jnp.allclose(out, ref, atol=2e-2, rtol=2e-2), \
        f"max abs err {jnp.max(jnp.abs(out - ref))}"

    # Lane-aligned batch (exercises the no-pad fast path and the 2-tile megacore split).
    N2 = 256
    x2 = jax.random.uniform(kx2, (N2, 1), jnp.float32, -1.0, 1.0)
    out2 = jax.block_until_ready(deep_neural_network(x2, params))
    ref2 = reference_forward(x2, params)
    assert out2.shape == (N2, 1)
    assert jnp.allclose(out2, ref2, atol=2e-2, rtol=2e-2), \
        f"max abs err {jnp.max(jnp.abs(out2 - ref2))}"

    print("KERNEL_OK")
</pallas_src>

<mosaic_0001>
module attributes {stable_mosaic.version = 11 : i64} {
  func.func @dnn_kernel(%arg0: i32, %arg1: memref<1x128xf32, #tpu.memory_space<vmem>>, %arg2: memref<32x1xf32, #tpu.memory_space<vmem>>, %arg3: memref<32x1xf32, #tpu.memory_space<vmem>>, %arg4: memref<32x32xbf16, #tpu.memory_space<vmem>>, %arg5: memref<32x1xf32, #tpu.memory_space<vmem>>, %arg6: memref<32x32xbf16, #tpu.memory_space<vmem>>, %arg7: memref<32x1xf32, #tpu.memory_space<vmem>>, %arg8: memref<32x1xf32, #tpu.memory_space<vmem>>, %arg9: memref<1x1xf32, #tpu.memory_space<vmem>>, %arg10: memref<1x128xf32, #tpu.memory_space<vmem>>) attributes {dimension_semantics = [#tpu.dimension_semantics<parallel>], iteration_bounds = array<i64: 1>, scalar_prefetch = 0 : i64, scratch_operands = 0 : i64, tpu.core_type = #tpu.core_type<tc>, window_params = [{transform_indices = @transform_0, window_bounds = array<i64: 1, 128>}, {pipeline_mode = #tpu.pipeline_mode<synchronous>, transform_indices = @transform_1, window_bounds = array<i64: 32, 1>}, {pipeline_mode = #tpu.pipeline_mode<synchronous>, transform_indices = @transform_2, window_bounds = array<i64: 32, 1>}, {pipeline_mode = #tpu.pipeline_mode<synchronous>, transform_indices = @transform_3, window_bounds = array<i64: 32, 32>}, {pipeline_mode = #tpu.pipeline_mode<synchronous>, transform_indices = @transform_4, window_bounds = array<i64: 32, 1>}, {pipeline_mode = #tpu.pipeline_mode<synchronous>, transform_indices = @transform_5, window_bounds = array<i64: 32, 32>}, {pipeline_mode = #tpu.pipeline_mode<synchronous>, transform_indices = @transform_6, window_bounds = array<i64: 32, 1>}, {pipeline_mode = #tpu.pipeline_mode<synchronous>, transform_indices = @transform_7, window_bounds = array<i64: 32, 1>}, {pipeline_mode = #tpu.pipeline_mode<synchronous>, transform_indices = @transform_8, window_bounds = array<i64: 1, 1>}, {transform_indices = @transform_9, window_bounds = array<i64: 1, 128>}]} {
    %c0 = arith.constant 0 : index
    %c0_0 = arith.constant 0 : index
    %0 = vector.load %arg1[%c0, %c0_0] : memref<1x128xf32, #tpu.memory_space<vmem>>, vector<1x128xf32>
    %c0_1 = arith.constant 0 : index
    %c0_2 = arith.constant 0 : index
    %1 = vector.load %arg2[%c0_1, %c0_2] : memref<32x1xf32, #tpu.memory_space<vmem>>, vector<32x1xf32>
    %2 = vector.broadcast %1 : vector<32x1xf32> to vector<32x128xf32>
    %3 = vector.broadcast %0 : vector<1x128xf32> to vector<32x128xf32>
    %4 = arith.mulf %2, %3 : vector<32x128xf32>
    %c0_3 = arith.constant 0 : index
    %c0_4 = arith.constant 0 : index
    %5 = vector.load %arg3[%c0_3, %c0_4] : memref<32x1xf32, #tpu.memory_space<vmem>>, vector<32x1xf32>
    %6 = vector.broadcast %5 : vector<32x1xf32> to vector<32x128xf32>
    %7 = arith.addf %4, %6 : vector<32x128xf32>
    %cst = arith.constant 0.000000e+00 : f32
    %8 = vector.broadcast %cst : f32 to vector<32x128xf32>
    %9 = arith.maximumf %7, %8 : vector<32x128xf32>
    %c0_5 = arith.constant 0 : index
    %c0_6 = arith.constant 0 : index
    %10 = vector.load %arg4[%c0_5, %c0_6] : memref<32x32xbf16, #tpu.memory_space<vmem>>, vector<32x32xbf16>
    %11 = arith.truncf %9 : vector<32x128xf32> to vector<32x128xbf16>
    %cst_7 = arith.constant dense<0.000000e+00> : vector<32x128xf32>
    %12 = tpu.matmul %10, %11, %cst_7 {dimension_numbers = #tpu.dot_dimension_numbers<[1], [0], [0], [1], [0, 0, 1, 1], [], []>} : vector<32x32xbf16>, vector<32x128xbf16>, vector<32x128xf32> -> vector<32x128xf32>
    %c0_8 = arith.constant 0 : index
    %c0_9 = arith.constant 0 : index
    %13 = vector.load %arg5[%c0_8, %c0_9] : memref<32x1xf32, #tpu.memory_space<vmem>>, vector<32x1xf32>
    %14 = vector.broadcast %13 : vector<32x1xf32> to vector<32x128xf32>
    %15 = arith.addf %12, %14 : vector<32x128xf32>
    %16 = math.absf %15 : vector<32x128xf32>
    %cst_10 = arith.constant 1.000000e+00 : f32
    %17 = vector.broadcast %cst_10 : f32 to vector<32x128xf32>
    %18 = arith.addf %17, %16 : vector<32x128xf32>
    %19 = tpu.reciprocal %18 {approx = true} : vector<32x128xf32> -> vector<32x128xf32>
    %20 = arith.mulf %15, %19 : vector<32x128xf32>
    %c0_11 = arith.constant 0 : index
    %c0_12 = arith.constant 0 : index
    %21 = vector.load %arg6[%c0_11, %c0_12] : memref<32x32xbf16, #tpu.memory_space<vmem>>, vector<32x32xbf16>
    %22 = arith.truncf %20 : vector<32x128xf32> to vector<32x128xbf16>
    %cst_13 = arith.constant dense<0.000000e+00> : vector<32x128xf32>
    %23 = tpu.matmul %21, %22, %cst_13 {dimension_numbers = #tpu.dot_dimension_numbers<[1], [0], [0], [1], [0, 0, 1, 1], [], []>} : vector<32x32xbf16>, vector<32x128xbf16>, vector<32x128xf32> -> vector<32x128xf32>
    %c0_14 = arith.constant 0 : index
    %c0_15 = arith.constant 0 : index
    %24 = vector.load %arg7[%c0_14, %c0_15] : memref<32x1xf32, #tpu.memory_space<vmem>>, vector<32x1xf32>
    %25 = vector.broadcast %24 : vector<32x1xf32> to vector<32x128xf32>
    %26 = arith.addf %23, %25 : vector<32x128xf32>
    %27 = math.tanh %26 : vector<32x128xf32>
    %c0_16 = arith.constant 0 : index
    %c0_17 = arith.constant 0 : index
    %28 = vector.load %arg8[%c0_16, %c0_17] : memref<32x1xf32, #tpu.memory_space<vmem>>, vector<32x1xf32>
    %29 = vector.broadcast %28 : vector<32x1xf32> to vector<32x128xf32>
    %30 = arith.mulf %27, %29 : vector<32x128xf32>
    %cst_18 = arith.constant dense<0.000000e+00> : vector<128xf32>
    %31 = vector.multi_reduction <add>, %30, %cst_18 [0] : vector<32x128xf32> to vector<128xf32>
    %32 = vector.shape_cast %31 : vector<128xf32> to vector<1x128xf32>
    %c0_19 = arith.constant 0 : index
    %c0_20 = arith.constant 0 : index
    %33 = vector.load %arg9[%c0_19, %c0_20] : memref<1x1xf32, #tpu.memory_space<vmem>>, vector<1x1xf32>
    %34 = vector.broadcast %33 : vector<1x1xf32> to vector<1x128xf32>
    %35 = arith.addf %32, %34 : vector<1x128xf32>
    %36 = math.tanh %35 : vector<1x128xf32>
    %c0_21 = arith.constant 0 : index
    %c0_22 = arith.constant 0 : index
    %37 = vector.load %arg10[%c0_21, %c0_22] : memref<1x128xf32, #tpu.memory_space<vmem>>, vector<1x128xf32>
    tpu.vector_store %arg10[%c0_21, %c0_22], %36 {strides = array<i32>} : memref<1x128xf32, #tpu.memory_space<vmem>>, vector<1x128xf32>,
    return
  }
  func.func @transform_0(%arg0: i32) -> (i32, i32) {
    %c0_i32 = arith.constant 0 : i32
    %c0_i32_0 = arith.constant 0 : i32
    return %c0_i32, %arg0 : i32, i32
  }
  func.func @transform_1(%arg0: i32) -> (i32, i32) {
    %c0_i32 = arith.constant 0 : i32
    %c0_i32_0 = arith.constant 0 : i32
    %c0_i32_1 = arith.constant 0 : i32
    return %c0_i32, %c0_i32_0 : i32, i32
  }
  func.func @transform_2(%arg0: i32) -> (i32, i32) {
    %c0_i32 = arith.constant 0 : i32
    %c0_i32_0 = arith.constant 0 : i32
    %c0_i32_1 = arith.constant 0 : i32
    return %c0_i32, %c0_i32_0 : i32, i32
  }
  func.func @transform_3(%arg0: i32) -> (i32, i32) {
    %c0_i32 = arith.constant 0 : i32
    %c0_i32_0 = arith.constant 0 : i32
    %c0_i32_1 = arith.constant 0 : i32
    return %c0_i32, %c0_i32_0 : i32, i32
  }
  func.func @transform_4(%arg0: i32) -> (i32, i32) {
    %c0_i32 = arith.constant 0 : i32
    %c0_i32_0 = arith.constant 0 : i32
    %c0_i32_1 = arith.constant 0 : i32
    return %c0_i32, %c0_i32_0 : i32, i32
  }
  func.func @transform_5(%arg0: i32) -> (i32, i32) {
    %c0_i32 = arith.constant 0 : i32
    %c0_i32_0 = arith.constant 0 : i32
    %c0_i32_1 = arith.constant 0 : i32
    return %c0_i32, %c0_i32_0 : i32, i32
  }
  func.func @transform_6(%arg0: i32) -> (i32, i32) {
    %c0_i32 = arith.constant 0 : i32
    %c0_i32_0 = arith.constant 0 : i32
    %c0_i32_1 = arith.constant 0 : i32
    return %c0_i32, %c0_i32_0 : i32, i32
  }
  func.func @transform_7(%arg0: i32) -> (i32, i32) {
    %c0_i32 = arith.constant 0 : i32
    %c0_i32_0 = arith.constant 0 : i32
    %c0_i32_1 = arith.constant 0 : i32
    return %c0_i32, %c0_i32_0 : i32, i32
  }
  func.func @transform_8(%arg0: i32) -> (i32, i32) {
    %c0_i32 = arith.constant 0 : i32
    %c0_i32_0 = arith.constant 0 : i32
    %c0_i32_1 = arith.constant 0 : i32
    return %c0_i32, %c0_i32_0 : i32, i32
  }
  func.func @transform_9(%arg0: i32) -> (i32, i32) {
    %c0_i32 = arith.constant 0 : i32
    %c0_i32_0 = arith.constant 0 : i32
    return %c0_i32, %arg0 : i32, i32
  }
}

</mosaic_0001>

<llo_original>
// kernel: deep_neural_network.1
$region0: #{deep_neural_network.1}
  #allocation0 [shape = 'u32[]', space=smem, size = 0x4, offset = 0x4, fixed_abs, tag = 'smem constant byte address 0x4 - core index']
  #allocation1 [shape = 'u32[144,128]{1,0:T(1,128)}', space=vmem, size = 0x12000, scoped, tag = 'internal scratch']
  #allocation2 [shape = 'f32[1,1]{1,0:T(1,128)S(1)}', space=vmem, size = 0x200, scoped, tag = 'scoped memory for deep_neural_network.1']
  %s0 = inlined_call_operand.vmem [shape: f32[1,128], index: 0, kind: input, shape index: {}]
  %s1 = inlined_call_operand.vmem [shape: f32[32,1], index: 1, kind: input, shape index: {}]
  %s2 = inlined_call_operand.vmem [shape: f32[32,1], index: 2, kind: input, shape index: {}]
  %s3 = inlined_call_operand.vmem [shape: bf16[32,32], index: 3, kind: input, shape index: {}]
  %s4 = inlined_call_operand.vmem [shape: f32[32,1], index: 4, kind: input, shape index: {}]
  %s5 = inlined_call_operand.vmem [shape: bf16[32,32], index: 5, kind: input, shape index: {}]
  %s6 = inlined_call_operand.vmem [shape: f32[32,1], index: 6, kind: input, shape index: {}]
  %s7 = inlined_call_operand.vmem [shape: f32[32,1], index: 7, kind: input, shape index: {}]
  %s8 = inlined_call_operand.<no memory space> [shape: f32[1,1], index: 8, kind: input, shape index: {}]
  %s9 = inlined_call_operand.vmem [shape: f32[1,128], index: 9, kind: output, shape index: {}]
  %s10 = sld [smem:[#allocation0]]
  $region46: #{deep_neural_network.1} parent=0
    _
  %s12 = ssub.s32 1, %s10
  %s13 = scalar_select 0, %s12, %s10
  %v14 = vstv %s8
  %15 = vst [vmem:[#allocation2] sm:$0x1] %v14
  // Predicated region
  $region2: #{deep_neural_network.1} parent=0 // pred_check
    _
  $region3: #{deep_neural_network.1} parent=0 // pred_check_branch
    %17 = sbr.rel (0) target = $region5
  $region4: #{deep_neural_network.1} parent=0 // pred_region
    _
  $region5: #{deep_neural_network.1} parent=0 // pred_fallthru
    _
  // Predicated region
  $region6: #{deep_neural_network.1} parent=0 // pred_check
    _
  $region7: #{deep_neural_network.1} parent=0 // pred_check_branch
    %19 = sbr.rel (0) target = $region9
  $region8: #{deep_neural_network.1} parent=0 // pred_region
    _
  $region9: #{deep_neural_network.1} parent=0 // pred_fallthru
    _
  // Predicated region
  $region10: #{deep_neural_network.1} parent=0 // pred_check
    _
  $region11: #{deep_neural_network.1} parent=0 // pred_check_branch
    %21 = sbr.rel (0) target = $region13
  $region12: #{deep_neural_network.1} parent=0 // pred_region
    _
  $region13: #{deep_neural_network.1} parent=0 // pred_fallthru
    _
  // Predicated region
  $region14: #{deep_neural_network.1} parent=0 // pred_check
    _
  $region15: #{deep_neural_network.1} parent=0 // pred_check_branch
    %23 = sbr.rel (0) target = $region17
  $region16: #{deep_neural_network.1} parent=0 // pred_region
    _
  $region17: #{deep_neural_network.1} parent=0 // pred_fallthru
    _
  // Predicated region
  $region18: #{deep_neural_network.1} parent=0 // pred_check
    _
  $region19: #{deep_neural_network.1} parent=0 // pred_check_branch
    %25 = sbr.rel (0) target = $region21
  $region20: #{deep_neural_network.1} parent=0 // pred_region
    _
  $region21: #{deep_neural_network.1} parent=0 // pred_fallthru
    _
  // Predicated region
  $region22: #{deep_neural_network.1} parent=0 // pred_check
    _
  $region23: #{deep_neural_network.1} parent=0 // pred_check_branch
    %27 = sbr.rel (0) target = $region25
  $region24: #{deep_neural_network.1} parent=0 // pred_region
    _
  $region25: #{deep_neural_network.1} parent=0 // pred_fallthru
    _
  // Predicated region
  $region26: #{deep_neural_network.1} parent=0 // pred_check
    _
  $region27: #{deep_neural_network.1} parent=0 // pred_check_branch
    %29 = sbr.rel (0) target = $region29
  $region28: #{deep_neural_network.1} parent=0 // pred_region
    _
  $region29: #{deep_neural_network.1} parent=0 // pred_fallthru
    _
  // Predicated region
  $region30: #{deep_neural_network.1} parent=0 // pred_check
    _
  $region31: #{deep_neural_network.1} parent=0 // pred_check_branch
    %31 = sbr.rel (0) target = $region33
  $region32: #{deep_neural_network.1} parent=0 // pred_region
    _
  $region33: #{deep_neural_network.1} parent=0 // pred_fallthru
    _
  // Predicated region
  $region34: #{deep_neural_network.1} parent=0 // pred_check
    _
  $region35: #{deep_neural_network.1} parent=0 // pred_check_branch
    %33 = sbr.rel (0) target = $region37
  $region36: #{deep_neural_network.1} parent=0 // pred_region
    _
  $region37: #{deep_neural_network.1} parent=0 // pred_fallthru
    _
  %v35 = vld [vmem:[%s0] sm:$0x1]
  %v36 = vld [vmem:[%s1] sm:$0xff]
  %v37 = vld [vmem:[%s1 + $0x8] sm:$0xff]
  %v38 = vld [vmem:[%s1 + $0x10] sm:$0xff]
  %v39 = vld [vmem:[%s1 + $0x18] sm:$0xff]
  %41 = vset.pattern.permute.xlu0 0
  %42 = vperm.xlu0 %41, %v36
  %v43 = vpop.permute.xlu0 %42
  %46 = vset.pattern.permute.xlu0 0
  %47 = vperm.xlu0 %46, %v37
  %v48 = vpop.permute.xlu0 %47
  %51 = vset.pattern.permute.xlu0 0
  %52 = vperm.xlu0 %51, %v38
  %v53 = vpop.permute.xlu0 %52
  %56 = vset.pattern.permute.xlu0 0
  %57 = vperm.xlu0 %56, %v39
  %v58 = vpop.permute.xlu0 %57
  %v61 = vlaneseq
  %v62 = vshrl.u32 %v61, 7
  %v63 = vsub.s32 0, %v62
  %v64 = vrot.slane %v35, %v63
  %v66 = vmul.f32 %v43, %v64
  %v67 = vmul.f32 %v48, %v64
  %v68 = vmul.f32 %v53, %v64
  %v69 = vmul.f32 %v58, %v64
  %v70 = vld [vmem:[%s2] sm:$0xff]
  %v71 = vld [vmem:[%s2 + $0x8] sm:$0xff]
  %v72 = vld [vmem:[%s2 + $0x10] sm:$0xff]
  %v73 = vld [vmem:[%s2 + $0x18] sm:$0xff]
  %75 = vset.pattern.permute.xlu0 0
  %76 = vperm.xlu0 %75, %v70
  %v77 = vpop.permute.xlu0 %76
  %80 = vset.pattern.permute.xlu0 0
  %81 = vperm.xlu0 %80, %v71
  %v82 = vpop.permute.xlu0 %81
  %85 = vset.pattern.permute.xlu0 0
  %86 = vperm.xlu0 %85, %v72
  %v87 = vpop.permute.xlu0 %86
  %90 = vset.pattern.permute.xlu0 0
  %91 = vperm.xlu0 %90, %v73
  %v92 = vpop.permute.xlu0 %91
  %v94 = vadd.f32 %v66, %v77
  %v95 = vadd.f32 %v67, %v82
  %v96 = vadd.f32 %v68, %v87
  %v97 = vadd.f32 %v69, %v92
  %v98 = vmax.f32 %v94, 0.0
  %v99 = vmax.f32 %v95, 0.0
  %v100 = vmax.f32 %v96, 0.0
  %v101 = vmax.f32 %v97, 0.0
  %v102 = vld [vmem:[%s3] sm:$0xf]
  %v103 = vld [vmem:[%s3 + $0x4] sm:$0xf]
  %v104 = vld [vmem:[%s3 + $0x8] sm:$0xf]
  %v105 = vld [vmem:[%s3 + $0xc] sm:$0xf]
  %v106 = vpack.c.bf16 %v99, %v98
  %v107 = vpack.c.bf16 %v101, %v100
  %v108 = vld [vmem:[%s4] sm:$0xff]
  %v109 = vld [vmem:[%s4 + $0x8] sm:$0xff]
  %v110 = vld [vmem:[%s4 + $0x10] sm:$0xff]
  %v111 = vld [vmem:[%s4 + $0x18] sm:$0xff]
  %113 = vset.pattern.permute.xlu0 0
  %114 = vperm.xlu0 %113, %v108
  %v115 = vpop.permute.xlu0 %114
  %118 = vset.pattern.permute.xlu0 0
  %119 = vperm.xlu0 %118, %v109
  %v120 = vpop.permute.xlu0 %119
  %123 = vset.pattern.permute.xlu0 0
  %124 = vperm.xlu0 %123, %v110
  %v125 = vpop.permute.xlu0 %124
  %128 = vset.pattern.permute.xlu0 0
  %129 = vperm.xlu0 %128, %v111
  %v130 = vpop.permute.xlu0 %129
  %v136 = vunpack.c.l.b16 %v102
  %v137 = vunpack.c.l.b16 %v103
  %v138 = vunpack.c.l.b16 %v104
  %v139 = vunpack.c.l.b16 %v105
  %v140 = vpack.c.b16 %v137, %v136
  %v141 = vpack.c.b16 %v139, %v138
  %vm142 = vcmask 261120
  %v144 = vsel %vm142, %v140, 0
  %v147 = vsel %vm142, %v141, 0
  %149 = vmatprep.subr.bf16.mxu0 0
  %150 = vmatpush1.bf16.msra.mxu0 %v106
  %151 = vmatprep.subr.bf16.mxu0 0
  %152 = vmatpush1.bf16.msra.mxu0 %v107
  %153 = vmatprep.subr.bf16.mxu0 0
  %154 = vmatpush1.bf16.msra.mxu0 0
  %155 = vmatprep.subr.bf16.mxu0 0
  %156 = vmatpush1.bf16.msra.mxu0 0
  %157 = vmatprep.subr.bf16.mxu0 0
  %158 = vmatpush1.bf16.msra.mxu0 0
  %159 = vmatprep.subr.bf16.mxu0 0
  %160 = vmatpush1.bf16.msra.mxu0 0
  %161 = vmatprep.subr.bf16.mxu0 0
  %162 = vmatpush1.bf16.msra.mxu0 0
  %163 = vmatprep.subr.bf16.mxu0 0
  %164 = vmatpush1.bf16.msra.mxu0 0
  %165 = vmatprep.subr.bf16.mxu0 0
  %166 = vmatpush1.bf16.msra.mxu0 0
  %167 = vmatprep.subr.bf16.mxu0 0
  %168 = vmatpush1.bf16.msra.mxu0 0
  %169 = vmatprep.subr.bf16.mxu0 0
  %170 = vmatpush1.bf16.msra.mxu0 0
  %171 = vmatprep.subr.bf16.mxu0 0
  %172 = vmatpush1.bf16.msra.mxu0 0
  %173 = vmatprep.subr.bf16.mxu0 0
  %174 = vmatpush1.bf16.msra.mxu0 0
  %175 = vmatprep.subr.bf16.mxu0 0
  %176 = vmatpush1.bf16.msra.mxu0 0
  %177 = vmatprep.subr.bf16.mxu0 0
  %178 = vmatpush1.bf16.msra.mxu0 0
  %179 = vmatprep.subr.bf16.mxu0 0
  %180 = vmatpush1.bf16.msra.mxu0 0
  %181 = vmatprep.mubr.bf16.mxu0 0
  %182 = vmatmul.mubr.bf16.gmra.mrb[0].mxu0 %v144
  %v183 = vpop.f32.mrb[0].mxu0
  %v184 = vadd.f32 %v115, %v183
  %v185 = vpop.f32.mrb[0].mxu0
  %v186 = vpop.f32.mrb[0].mxu0
  %v187 = vadd.f32 %v120, %v186
  %v188 = vpop.f32.mrb[0].mxu0
  %189 = vmatprep.mubr.bf16.mxu0 0
  %190 = vmatmul.mubr.bf16.gmra.mrb[0].mxu0 %v147
  %v191 = vpop.f32.mrb[0].mxu0
  %v192 = vadd.f32 %v125, %v191
  %v193 = vpop.f32.mrb[0].mxu0
  %v194 = vpop.f32.mrb[0].mxu0
  %v195 = vadd.f32 %v130, %v194
  %v196 = vpop.f32.mrb[0].mxu0
  %197 = vdwg.mxu0
  %v198 = vand.u32 2147483647, %v184
  %v199 = vand.u32 2147483647, %v187
  %v200 = vand.u32 2147483647, %v192
  %v201 = vand.u32 2147483647, %v195
  %v202 = vadd.f32 %v198, 1.0
  %v203 = vadd.f32 %v199, 1.0
  %v204 = vadd.f32 %v200, 1.0
  %v205 = vadd.f32 %v201, 1.0
  %v206 = vrcp.pop %v202
  %v207 = vrcp.pop %v203
  %v208 = vrcp.pop %v204
  %v209 = vrcp.pop %v205
  %v210 = vmul.f32 %v184, %v206
  %v211 = vmul.f32 %v187, %v207
  %v212 = vmul.f32 %v192, %v208
  %v213 = vmul.f32 %v195, %v209
  %v214 = vld [vmem:[%s5] sm:$0xf]
  %v215 = vld [vmem:[%s5 + $0x4] sm:$0xf]
  %v216 = vld [vmem:[%s5 + $0x8] sm:$0xf]
  %v217 = vld [vmem:[%s5 + $0xc] sm:$0xf]
  %v218 = vpack.c.bf16 %v211, %v210
  %v219 = vpack.c.bf16 %v213, %v212
  %v220 = vld [vmem:[%s6] sm:$0xff]
  %v221 = vld [vmem:[%s6 + $0x8] sm:$0xff]
  %v222 = vld [vmem:[%s6 + $0x10] sm:$0xff]
  %v223 = vld [vmem:[%s6 + $0x18] sm:$0xff]
  %225 = vset.pattern.permute.xlu0 0
  %226 = vperm.xlu0 %225, %v220
  %v227 = vpop.permute.xlu0 %226
  %230 = vset.pattern.permute.xlu0 0
  %231 = vperm.xlu0 %230, %v221
  %v232 = vpop.permute.xlu0 %231
  %235 = vset.pattern.permute.xlu0 0
  %236 = vperm.xlu0 %235, %v222
  %v237 = vpop.permute.xlu0 %236
  %240 = vset.pattern.permute.xlu0 0
  %241 = vperm.xlu0 %240, %v223
  %v242 = vpop.permute.xlu0 %241
  %v248 = vunpack.c.l.b16 %v214
  %v249 = vunpack.c.l.b16 %v215
  %v250 = vunpack.c.l.b16 %v216
  %v251 = vunpack.c.l.b16 %v217
  %v252 = vpack.c.b16 %v249, %v248
  %v253 = vpack.c.b16 %v251, %v250
  %v255 = vsel %vm142, %v252, 0
  %v258 = vsel %vm142, %v253, 0
  %260 = vmatprep.subr.bf16.mxu0 0
  %261 = vmatpush1.bf16.msra.mxu0 %v218
  %262 = vmatprep.subr.bf16.mxu0 0
  %263 = vmatpush1.bf16.msra.mxu0 %v219
  %264 = vmatprep.subr.bf16.mxu0 0
  %265 = vmatpush1.bf16.msra.mxu0 0
  %266 = vmatprep.subr.bf16.mxu0 0
  %267 = vmatpush1.bf16.msra.mxu0 0
  %268 = vmatprep.subr.bf16.mxu0 0
  %269 = vmatpush1.bf16.msra.mxu0 0
  %270 = vmatprep.subr.bf16.mxu0 0
  %271 = vmatpush1.bf16.msra.mxu0 0
  %272 = vmatprep.subr.bf16.mxu0 0
  %273 = vmatpush1.bf16.msra.mxu0 0
  %274 = vmatprep.subr.bf16.mxu0 0
  %275 = vmatpush1.bf16.msra.mxu0 0
  %276 = vmatprep.subr.bf16.mxu0 0
  %277 = vmatpush1.bf16.msra.mxu0 0
  %278 = vmatprep.subr.bf16.mxu0 0
  %279 = vmatpush1.bf16.msra.mxu0 0
  %280 = vmatprep.subr.bf16.mxu0 0
  %281 = vmatpush1.bf16.msra.mxu0 0
  %282 = vmatprep.subr.bf16.mxu0 0
  %283 = vmatpush1.bf16.msra.mxu0 0
  %284 = vmatprep.subr.bf16.mxu0 0
  %285 = vmatpush1.bf16.msra.mxu0 0
  %286 = vmatprep.subr.bf16.mxu0 0
  %287 = vmatpush1.bf16.msra.mxu0 0
  %288 = vmatprep.subr.bf16.mxu0 0
  %289 = vmatpush1.bf16.msra.mxu0 0
  %290 = vmatprep.subr.bf16.mxu0 0
  %291 = vmatpush1.bf16.msra.mxu0 0
  %292 = vmatprep.mubr.bf16.mxu0 0
  %293 = vmatmul.mubr.bf16.gmra.mrb[0].mxu0 %v255
  %v294 = vpop.f32.mrb[0].mxu0
  %v295 = vadd.f32 %v227, %v294
  %v296 = vpop.f32.mrb[0].mxu0
  %v297 = vpop.f32.mrb[0].mxu0
  %v298 = vadd.f32 %v232, %v297
  %v299 = vpop.f32.mrb[0].mxu0
  %300 = vmatprep.mubr.bf16.mxu0 0
  %301 = vmatmul.mubr.bf16.gmra.mrb[0].mxu0 %v258
  %v302 = vpop.f32.mrb[0].mxu0
  %v303 = vadd.f32 %v237, %v302
  %v304 = vpop.f32.mrb[0].mxu0
  %v305 = vpop.f32.mrb[0].mxu0
  %v306 = vadd.f32 %v242, %v305
  %v307 = vpop.f32.mrb[0].mxu0
  %308 = vdwg.mxu0
  %v309 = vtanh.pop %v295
  %v310 = vtanh.pop %v298
  %v311 = vtanh.pop %v303
  %v312 = vtanh.pop %v306
  %v313 = vld [vmem:[%s7] sm:$0xff]
  %v314 = vld [vmem:[%s7 + $0x8] sm:$0xff]
  %v315 = vld [vmem:[%s7 + $0x10] sm:$0xff]
  %v316 = vld [vmem:[%s7 + $0x18] sm:$0xff]
  %318 = vset.pattern.permute.xlu0 0
  %319 = vperm.xlu0 %318, %v313
  %v320 = vpop.permute.xlu0 %319
  %323 = vset.pattern.permute.xlu0 0
  %324 = vperm.xlu0 %323, %v314
  %v325 = vpop.permute.xlu0 %324
  %328 = vset.pattern.permute.xlu0 0
  %329 = vperm.xlu0 %328, %v315
  %v330 = vpop.permute.xlu0 %329
  %333 = vset.pattern.permute.xlu0 0
  %334 = vperm.xlu0 %333, %v316
  %v335 = vpop.permute.xlu0 %334
  %v337 = vmul.f32 %v309, %v320
  %v338 = vmul.f32 %v310, %v325
  %v339 = vmul.f32 %v311, %v330
  %v340 = vmul.f32 %v312, %v335
  %v341 = vadd.f32 %v337, %v338
  %v342 = vadd.f32 %v341, %v339
  %v343 = vadd.f32 %v342, %v340
  %v344 = vrot.slane %v343, 4
  %v345 = vadd.f32 %v343, %v344
  %v346 = vrot.slane %v345, 2
  %v347 = vadd.f32 %v345, %v346
  %v348 = vrot.slane %v347, 1
  %v349 = vadd.f32 %v347, %v348
  %v350 = vld [vmem:[#allocation2] sm:$0x1]
  %352 = vset.pattern.permute.xlu0 0
  %353 = vperm.xlu0 %352, %v350
  %v354 = vpop.permute.xlu0 %353
  %v356 = vlaneseq
  %v357 = vshrl.u32 %v356, 7
  %v358 = vsub.s32 0, %v357
  %v359 = vrot.slane %v354, %v358
  %v360 = vadd.f32 %v349, %v359
  %v361 = vtanh.pop %v360
  %362 = vst [vmem:[%s9] sm:$0x1] %v361
  // Predicated region
  $region38: #{deep_neural_network.1} parent=0 // pred_check
    _
  $region39: #{deep_neural_network.1} parent=0 // pred_check_branch
    %364 = sbr.rel (0) target = $region41
  $region40: #{deep_neural_network.1} parent=0 // pred_region
    _
  $region41: #{deep_neural_network.1} parent=0 // pred_fallthru
    _
  // Predicated region
  $region42: #{deep_neural_network.1} parent=0 // pred_check
    _
  $region43: #{deep_neural_network.1} parent=0 // pred_check_branch
    %366 = sbr.rel (0) target = $region45
  $region44: #{deep_neural_network.1} parent=0 // pred_region
    _
  $region45: #{deep_neural_network.1} parent=0 // pred_fallthru
    _

</llo_original>
